<compile_context>
chip_gen: v5e
topology: v5e:2x2
jax: 0.10.0
libtpu: 0.0.40
codegen_flags: <defaults>
</compile_context>

<pallas_src>
import jax
import jax.numpy as jnp
from jax.experimental import pallas as pl
from jax.experimental.pallas import tpu as pltpu

IN_DIM = 3
HID_DIM = 2
OUT_DIM = 1


def mlp_kernel(w1_ref, b1_ref, w2_ref, b2_ref, x_ref, o_ref):
    # x_ref: (IN_DIM, TILE_B) lane-dense VMEM tile.
    # w1_ref (3,2), b1_ref (2,), w2_ref (2,1), b2_ref (1,): SMEM scalars.
    x = x_ref[...]                                            # (3, TILE_B) f32
    out = jnp.zeros((1, x.shape[1]), dtype=jnp.float32) + b2_ref[0]
    # Fully unrolled fused layer: out = sum_j w2[j] * relu(sum_k w1[k,j]*x_k + b1[j]) + b2
    for j in range(HID_DIM):
        h = x[0:1, :] * w1_ref[0, j]
        for k in range(1, IN_DIM):
            h = h + x[k:k + 1, :] * w1_ref[k, j]
        h = jnp.maximum(h + b1_ref[j], 0.0)                   # bias (scalar) + ReLU
        out = out + h * w2_ref[j, 0]
    o_ref[...] = out                                          # (1, TILE_B) lane-dense store


def mlp_forward(x, w1, b1, w2, b2, *, tile_b=512):
    """x: (B, 3) f32;  w1: (3, 2), b1: (2,), w2: (2, 1), b2: (1,) -> (B, 1)."""
    B = x.shape[0]
    grid_b = pl.cdiv(B, tile_b)
    b_pad = grid_b * tile_b

    # Put batch on the lane axis and zero-pad it up to the tile grid.
    x_t = jnp.zeros((IN_DIM, b_pad), jnp.float32).at[:, :B].set(x.T)

    smem = pl.BlockSpec(memory_space=pltpu.MemorySpace.SMEM)
    out_t = pl.pallas_call(
        mlp_kernel,
        out_shape=jax.ShapeDtypeStruct((OUT_DIM, b_pad), jnp.float32),
        grid=(grid_b,),
        in_specs=[
            smem,                                              # w1 (3, 2)
            smem,                                              # b1 (2,)
            smem,                                              # w2 (2, 1)
            smem,                                              # b2 (1,)
            pl.BlockSpec((IN_DIM, tile_b), lambda i: (0, i)),  # x  (3, TILE_B)
        ],
        out_specs=pl.BlockSpec((OUT_DIM, tile_b), lambda i: (0, i)),
        compiler_params=pltpu.CompilerParams(
            dimension_semantics=("parallel",)),
    )(w1, b1, w2, b2, x_t)

    return out_t[:, :B].T                                      # (B, 1)


def reference_forward(x, w1, b1, w2, b2):
    h = jnp.maximum(x @ w1 + b1, 0.0)
    return h @ w2 + b2


if __name__ == "__main__":
    key = jax.random.PRNGKey(0)
    kx, k1, kb1, k2, kb2 = jax.random.split(key, 5)

    batch = 8
    # Parameters stored transposed vs. PyTorch nn.Linear so the math is x @ W.
    x = jax.random.normal(kx, (batch, IN_DIM), dtype=jnp.float32)
    w1 = jax.random.normal(k1, (IN_DIM, HID_DIM), dtype=jnp.float32) * 0.5
    b1 = jax.random.normal(kb1, (HID_DIM,), dtype=jnp.float32) * 0.1
    w2 = jax.random.normal(k2, (HID_DIM, OUT_DIM), dtype=jnp.float32) * 0.5
    b2 = jax.random.normal(kb2, (OUT_DIM,), dtype=jnp.float32) * 0.1

    out = mlp_forward(x, w1, b1, w2, b2)
    jax.block_until_ready(out)

    ref = reference_forward(x, w1, b1, w2, b2)
    assert out.shape == (batch, OUT_DIM)
    assert jnp.allclose(out, ref, atol=1e-5, rtol=1e-5)

    # Also check the exact input from the original spec: x = torch.ones(3).
    x1 = jnp.ones((1, IN_DIM), dtype=jnp.float32)
    out1 = mlp_forward(x1, w1, b1, w2, b2)
    jax.block_until_ready(out1)
    assert jnp.allclose(out1, reference_forward(x1, w1, b1, w2, b2),
                        atol=1e-5, rtol=1e-5)

    print("KERNEL_OK")
</pallas_src>

<mosaic_0001>
module attributes {stable_mosaic.version = 11 : i64} {
  func.func @mlp_kernel(%arg0: i32, %arg1: memref<3x2xf32, #tpu.memory_space<smem>>, %arg2: memref<2xf32, #tpu.memory_space<smem>>, %arg3: memref<2x1xf32, #tpu.memory_space<smem>>, %arg4: memref<1xf32, #tpu.memory_space<smem>>, %arg5: memref<3x512xf32, #tpu.memory_space<vmem>>, %arg6: memref<1x512xf32, #tpu.memory_space<vmem>>) attributes {dimension_semantics = [#tpu.dimension_semantics<parallel>], iteration_bounds = array<i64: 1>, scalar_prefetch = 0 : i64, scratch_operands = 0 : i64, tpu.core_type = #tpu.core_type<tc>, window_params = [{transform_indices = @transform_0, window_bounds = array<i64: 3, 2>}, {transform_indices = @transform_1, window_bounds = array<i64: 2>}, {transform_indices = @transform_2, window_bounds = array<i64: 2, 1>}, {transform_indices = @transform_3, window_bounds = array<i64: 1>}, {transform_indices = @transform_4, window_bounds = array<i64: 3, 512>}, {transform_indices = @transform_5, window_bounds = array<i64: 1, 512>}]} {
    %c0 = arith.constant 0 : index
    %c0_0 = arith.constant 0 : index
    %0 = vector.load %arg5[%c0, %c0_0] : memref<3x512xf32, #tpu.memory_space<vmem>>, vector<3x512xf32>
    %cst = arith.constant 0.000000e+00 : f32
    %1 = vector.broadcast %cst : f32 to vector<1x512xf32>
    %c0_1 = arith.constant 0 : index
    %2 = memref.load %arg4[%c0_1] : memref<1xf32, #tpu.memory_space<smem>>
    %3 = vector.broadcast %2 : f32 to vector<1x512xf32>
    %4 = arith.addf %1, %3 : vector<1x512xf32>
    %5 = vector.extract_strided_slice %0 {offsets = [0, 0], sizes = [1, 512], strides = [1, 1]} : vector<3x512xf32> to vector<1x512xf32>
    %c0_2 = arith.constant 0 : index
    %c0_3 = arith.constant 0 : index
    %6 = memref.load %arg1[%c0_2, %c0_3] : memref<3x2xf32, #tpu.memory_space<smem>>
    %7 = vector.broadcast %6 : f32 to vector<1x512xf32>
    %8 = arith.mulf %5, %7 : vector<1x512xf32>
    %9 = vector.extract_strided_slice %0 {offsets = [1, 0], sizes = [1, 512], strides = [1, 1]} : vector<3x512xf32> to vector<1x512xf32>
    %c1 = arith.constant 1 : index
    %c0_4 = arith.constant 0 : index
    %10 = memref.load %arg1[%c1, %c0_4] : memref<3x2xf32, #tpu.memory_space<smem>>
    %11 = vector.broadcast %10 : f32 to vector<1x512xf32>
    %12 = arith.mulf %9, %11 : vector<1x512xf32>
    %13 = arith.addf %8, %12 : vector<1x512xf32>
    %14 = vector.extract_strided_slice %0 {offsets = [2, 0], sizes = [1, 512], strides = [1, 1]} : vector<3x512xf32> to vector<1x512xf32>
    %c2 = arith.constant 2 : index
    %c0_5 = arith.constant 0 : index
    %15 = memref.load %arg1[%c2, %c0_5] : memref<3x2xf32, #tpu.memory_space<smem>>
    %16 = vector.broadcast %15 : f32 to vector<1x512xf32>
    %17 = arith.mulf %14, %16 : vector<1x512xf32>
    %18 = arith.addf %13, %17 : vector<1x512xf32>
    %c0_6 = arith.constant 0 : index
    %19 = memref.load %arg2[%c0_6] : memref<2xf32, #tpu.memory_space<smem>>
    %20 = vector.broadcast %19 : f32 to vector<1x512xf32>
    %21 = arith.addf %18, %20 : vector<1x512xf32>
    %cst_7 = arith.constant 0.000000e+00 : f32
    %22 = vector.broadcast %cst_7 : f32 to vector<1x512xf32>
    %23 = arith.maximumf %21, %22 : vector<1x512xf32>
    %c0_8 = arith.constant 0 : index
    %c0_9 = arith.constant 0 : index
    %24 = memref.load %arg3[%c0_8, %c0_9] : memref<2x1xf32, #tpu.memory_space<smem>>
    %25 = vector.broadcast %24 : f32 to vector<1x512xf32>
    %26 = arith.mulf %23, %25 : vector<1x512xf32>
    %27 = arith.addf %4, %26 : vector<1x512xf32>
    %28 = vector.extract_strided_slice %0 {offsets = [0, 0], sizes = [1, 512], strides = [1, 1]} : vector<3x512xf32> to vector<1x512xf32>
    %c0_10 = arith.constant 0 : index
    %c1_11 = arith.constant 1 : index
    %29 = memref.load %arg1[%c0_10, %c1_11] : memref<3x2xf32, #tpu.memory_space<smem>>
    %30 = vector.broadcast %29 : f32 to vector<1x512xf32>
    %31 = arith.mulf %28, %30 : vector<1x512xf32>
    %32 = vector.extract_strided_slice %0 {offsets = [1, 0], sizes = [1, 512], strides = [1, 1]} : vector<3x512xf32> to vector<1x512xf32>
    %c1_12 = arith.constant 1 : index
    %c1_13 = arith.constant 1 : index
    %33 = memref.load %arg1[%c1_12, %c1_13] : memref<3x2xf32, #tpu.memory_space<smem>>
    %34 = vector.broadcast %33 : f32 to vector<1x512xf32>
    %35 = arith.mulf %32, %34 : vector<1x512xf32>
    %36 = arith.addf %31, %35 : vector<1x512xf32>
    %37 = vector.extract_strided_slice %0 {offsets = [2, 0], sizes = [1, 512], strides = [1, 1]} : vector<3x512xf32> to vector<1x512xf32>
    %c2_14 = arith.constant 2 : index
    %c1_15 = arith.constant 1 : index
    %38 = memref.load %arg1[%c2_14, %c1_15] : memref<3x2xf32, #tpu.memory_space<smem>>
    %39 = vector.broadcast %38 : f32 to vector<1x512xf32>
    %40 = arith.mulf %37, %39 : vector<1x512xf32>
    %41 = arith.addf %36, %40 : vector<1x512xf32>
    %c1_16 = arith.constant 1 : index
    %42 = memref.load %arg2[%c1_16] : memref<2xf32, #tpu.memory_space<smem>>
    %43 = vector.broadcast %42 : f32 to vector<1x512xf32>
    %44 = arith.addf %41, %43 : vector<1x512xf32>
    %cst_17 = arith.constant 0.000000e+00 : f32
    %45 = vector.broadcast %cst_17 : f32 to vector<1x512xf32>
    %46 = arith.maximumf %44, %45 : vector<1x512xf32>
    %c1_18 = arith.constant 1 : index
    %c0_19 = arith.constant 0 : index
    %47 = memref.load %arg3[%c1_18, %c0_19] : memref<2x1xf32, #tpu.memory_space<smem>>
    %48 = vector.broadcast %47 : f32 to vector<1x512xf32>
    %49 = arith.mulf %46, %48 : vector<1x512xf32>
    %50 = arith.addf %27, %49 : vector<1x512xf32>
    %c0_20 = arith.constant 0 : index
    %c0_21 = arith.constant 0 : index
    %51 = vector.load %arg6[%c0_20, %c0_21] : memref<1x512xf32, #tpu.memory_space<vmem>>, vector<1x512xf32>
    tpu.vector_store %arg6[%c0_20, %c0_21], %50 {strides = array<i32>} : memref<1x512xf32, #tpu.memory_space<vmem>>, vector<1x512xf32>,
    return
  }
  func.func @transform_0(%arg0: i32) -> (i32, i32) {
    %c0_i32 = arith.constant 0 : i32
    %c0_i32_0 = arith.constant 0 : i32
    %c0_i32_1 = arith.constant 0 : i32
    return %c0_i32, %c0_i32_0 : i32, i32
  }
  func.func @transform_1(%arg0: i32) -> i32 {
    %c0_i32 = arith.constant 0 : i32
    %c0_i32_0 = arith.constant 0 : i32
    return %c0_i32 : i32
  }
  func.func @transform_2(%arg0: i32) -> (i32, i32) {
    %c0_i32 = arith.constant 0 : i32
    %c0_i32_0 = arith.constant 0 : i32
    %c0_i32_1 = arith.constant 0 : i32
    return %c0_i32, %c0_i32_0 : i32, i32
  }
  func.func @transform_3(%arg0: i32) -> i32 {
    %c0_i32 = arith.constant 0 : i32
    %c0_i32_0 = arith.constant 0 : i32
    return %c0_i32 : i32
  }
  func.func @transform_4(%arg0: i32) -> (i32, i32) {
    %c0_i32 = arith.constant 0 : i32
    %c0_i32_0 = arith.constant 0 : i32
    return %c0_i32, %arg0 : i32, i32
  }
  func.func @transform_5(%arg0: i32) -> (i32, i32) {
    %c0_i32 = arith.constant 0 : i32
    %c0_i32_0 = arith.constant 0 : i32
    return %c0_i32, %arg0 : i32, i32
  }
}

</mosaic_0001>

<llo_original>
// kernel: tpu_custom_call.1
$region0: #{tpu_custom_call.1}
  #allocation0 [shape = 'u32[]', space=smem, size = 0x4, offset = 0x4, fixed_abs, tag = 'smem constant byte address 0x4 - core index']
  #allocation1 [shape = 'u32[72,128]{1,0:T(1,128)}', space=vmem, size = 0x9000, scoped, tag = 'internal scratch']
  #allocation2 [shape = 'f32[1]{0:T(128)S(6)}', space=smem, size = 0x200, scoped, tag = 'scoped memory for tpu_custom_call.1']
  %s0 = inlined_call_operand.vmem [shape: f32[3,2], index: 0, kind: input, shape index: {}]
  %s1 = inlined_call_operand.vmem [shape: f32[2], index: 1, kind: input, shape index: {}]
  %s2 = inlined_call_operand.vmem [shape: f32[2,1], index: 2, kind: input, shape index: {}]
  %s3 = inlined_call_operand.<no memory space> [shape: f32[1], index: 3, kind: input, shape index: {}]
  %s4 = inlined_call_operand.hbm [shape: f32[3,512], index: 4, kind: input, shape index: {}]
  %s5 = inlined_call_operand.hbm [shape: f32[1,512], index: 5, kind: output, shape index: {}]
  %s6 = sld [smem:[#allocation0]]
  $region46: #{tpu_custom_call.1} parent=0
    _
  %s8 = ssub.s32 1, %s6
  %s9 = scalar_select 0, %s8, %s6
  %10 = sst [smem:[#allocation2]] %s3
  $region1: #{tpu_custom_call.1} parent=0
    #allocation3 [shape = 'u8[2048]{0}', space=smem, size = 0x800, scoped, tag = 'input window, operand 0, single buffered']
    #allocation4 [shape = 's32[1]{0}', space=sflag, size = 0x4, scoped, tag = 'scoped memory for tpu_custom_call.1']
    #allocation5 [shape = 's32[1]{0}', space=sflag, size = 0x4, scoped, tag = 'scoped memory for tpu_custom_call.1']
    #allocation6 [shape = 's32[1]{0}', space=sflag, size = 0x4, scoped, tag = 'scoped memory for tpu_custom_call.1']
    #allocation7 [shape = 'u8[512]{0}', space=smem, size = 0x200, scoped, tag = 'input window, operand 1, single buffered']
    #allocation8 [shape = 's32[1]{0}', space=sflag, size = 0x4, scoped, tag = 'scoped memory for tpu_custom_call.1']
    #allocation9 [shape = 'u8[1024]{0}', space=smem, size = 0x400, scoped, tag = 'input window, operand 2, single buffered']
    #allocation10 [shape = 'u8[8192]{0}', space=vmem, size = 0x2000, scoped, tag = 'input window, operand 4, single buffered']
    #allocation11 [shape = 'u8[2048]{0}', space=vmem, size = 0x800, scoped, tag = 'output window, operand 0, single buffered']
    %11 = vsyncpa [#allocation6], 0
    %12 = vsyncpa [#allocation8], 0
    %13 = vsyncpa [#allocation4], 0
    %14 = vsyncpa [#allocation5], 0
    // Predicated region
    $region2: #{tpu_custom_call.1} parent=1 // pred_check
      _
    $region3: #{tpu_custom_call.1} parent=1 // pred_check_branch
      %16 = sbr.rel (0) target = $region5
    $region4: #{tpu_custom_call.1} parent=1 // pred_region
      %18 = vsyncadd [#allocation6], 0
      %s20 = sshll.u32 %s0, 4
      %s21 = int_to_ptr.vmem [resolvable:$true] %s20
      %23 = dma.vmem_to_smem %s21, 64, [#allocation3], [#allocation6]
    $region5: #{tpu_custom_call.1} parent=1 // pred_fallthru
      _
    // Predicated region
    $region6: #{tpu_custom_call.1} parent=1 // pred_check
      _
    $region7: #{tpu_custom_call.1} parent=1 // pred_check_branch
      %25 = sbr.rel (0) target = $region9
    $region8: #{tpu_custom_call.1} parent=1 // pred_region
      %27 = vsyncadd [#allocation8], 0
      %s29 = sshll.u32 %s1, 4
      %s30 = int_to_ptr.vmem [resolvable:$true] %s29
      %32 = dma.vmem_to_smem %s30, 16, [#allocation7], [#allocation8]
    $region9: #{tpu_custom_call.1} parent=1 // pred_fallthru
      _
    // Predicated region
    $region10: #{tpu_custom_call.1} parent=1 // pred_check
      _
    $region11: #{tpu_custom_call.1} parent=1 // pred_check_branch
      %34 = sbr.rel (0) target = $region13
    $region12: #{tpu_custom_call.1} parent=1 // pred_region
      %36 = vsyncadd [#allocation8], 0
      %s38 = sshll.u32 %s2, 4
      %s39 = int_to_ptr.vmem [resolvable:$true] %s38
      %41 = dma.vmem_to_smem %s39, 32, [#allocation9], [#allocation8]
    $region13: #{tpu_custom_call.1} parent=1 // pred_fallthru
      _
    // Predicated region
    $region14: #{tpu_custom_call.1} parent=1 // pred_check
      _
    $region15: #{tpu_custom_call.1} parent=1 // pred_check_branch
      %43 = sbr.rel (0) target = $region17
    $region16: #{tpu_custom_call.1} parent=1 // pred_region
      _
    $region17: #{tpu_custom_call.1} parent=1 // pred_fallthru
      _
    // Predicated region
    $region18: #{tpu_custom_call.1} parent=1 // pred_check
      _
    $region19: #{tpu_custom_call.1} parent=1 // pred_check_branch
      %45 = sbr.rel (0) target = $region21
    $region20: #{tpu_custom_call.1} parent=1 // pred_region
      %47 = vsyncadd [#allocation4], 0
      %s49 = sshll.u32 %s4, 4
      %s50 = int_to_ptr.hbm [resolvable:$true] %s49
      %s51 = sshll.u32 [#allocation10], 4
      %s52 = int_to_ptr.vmem [resolvable:$true] %s51
      %54 = dma.hbm_to_vmem [thread:$0]  %s50, 256, %s52, [#allocation4]
    $region21: #{tpu_custom_call.1} parent=1 // pred_fallthru
      _
    // Predicated region
    $region22: #{tpu_custom_call.1} parent=1 // pred_check
      _
    $region23: #{tpu_custom_call.1} parent=1 // pred_check_branch
      %56 = sbr.rel (0) target = $region25
    $region24: #{tpu_custom_call.1} parent=1 // pred_region
      %58 = dma.done [#allocation6], 64
    $region25: #{tpu_custom_call.1} parent=1 // pred_fallthru
      _
    // Predicated region
    $region26: #{tpu_custom_call.1} parent=1 // pred_check
      _
    $region27: #{tpu_custom_call.1} parent=1 // pred_check_branch
      %60 = sbr.rel (0) target = $region29
    $region28: #{tpu_custom_call.1} parent=1 // pred_region
      %62 = dma.done [#allocation8], 16
    $region29: #{tpu_custom_call.1} parent=1 // pred_fallthru
      _
    // Predicated region
    $region30: #{tpu_custom_call.1} parent=1 // pred_check
      _
    $region31: #{tpu_custom_call.1} parent=1 // pred_check_branch
      %64 = sbr.rel (0) target = $region33
    $region32: #{tpu_custom_call.1} parent=1 // pred_region
      %66 = dma.done [#allocation8], 32
    $region33: #{tpu_custom_call.1} parent=1 // pred_fallthru
      _
    // Predicated region
    $region34: #{tpu_custom_call.1} parent=1 // pred_check
      _
    $region35: #{tpu_custom_call.1} parent=1 // pred_check_branch
      %68 = sbr.rel (0) target = $region37
    $region36: #{tpu_custom_call.1} parent=1 // pred_region
      %70 = dma.done [#allocation4], 256
    $region37: #{tpu_custom_call.1} parent=1 // pred_fallthru
      _
    %71 = sfence
    %v72 = vld [vmem:[#allocation10] sm:$0x77]
    %v73 = vld [vmem:[#allocation10 + $0x8] sm:$0x77]
    %s74 = sld [smem:[#allocation2]]
    %v75 = vstv %s74
    %v76 = vadd.f32 %v75, 0.0
    %s77 = sld [smem:[#allocation3]]
    %v78 = vstv %s77
    %v79 = vmul.f32 %v72, %v78
    %v80 = vmul.f32 %v73, %v78
    %s81 = sld [smem:[#allocation3 + $0x80]]
    %v82 = vstv %s81
    %v83 = vmul.f32 %v72, %v82
    %v84 = vmul.f32 %v73, %v82
    %v87 = vrot.slane %v83, 5
    %v88 = vrot.slane %v87, 4
    %v89 = vrot.slane %v84, 5
    %v90 = vrot.slane %v89, 4
    %v93 = vadd.f32 %v79, %v88
    %v94 = vadd.f32 %v80, %v90
    %s95 = sld [smem:[#allocation3 + $0x100]]
    %v96 = vstv %s95
    %v97 = vmul.f32 %v72, %v96
    %v98 = vmul.f32 %v73, %v96
    %v101 = vrot.slane %v97, 6
    %v102 = vrot.slane %v101, 4
    %v103 = vrot.slane %v98, 6
    %v104 = vrot.slane %v103, 4
    %v107 = vadd.f32 %v93, %v102
    %v108 = vadd.f32 %v94, %v104
    %s109 = sld [smem:[#allocation7]]
    %v110 = vstv %s109
    %v111 = vadd.f32 %v107, %v110
    %v112 = vadd.f32 %v108, %v110
    %v113 = vmax.f32 %v111, 0.0
    %v114 = vmax.f32 %v112, 0.0
    %s115 = sld [smem:[#allocation9]]
    %v116 = vstv %s115
    %v117 = vmul.f32 %v113, %v116
    %v118 = vmul.f32 %v114, %v116
    %v119 = vadd.f32 %v76, %v117
    %v120 = vadd.f32 %v76, %v118
    %s121 = sld [smem:[#allocation3 + $0x1]]
    %v122 = vstv %s121
    %v123 = vmul.f32 %v72, %v122
    %v124 = vmul.f32 %v73, %v122
    %s125 = sld [smem:[#allocation3 + $0x81]]
    %v126 = vstv %s125
    %v127 = vmul.f32 %v72, %v126
    %v128 = vmul.f32 %v73, %v126
    %v131 = vrot.slane %v127, 5
    %v132 = vrot.slane %v131, 4
    %v133 = vrot.slane %v128, 5
    %v134 = vrot.slane %v133, 4
    %v137 = vadd.f32 %v123, %v132
    %v138 = vadd.f32 %v124, %v134
    %s139 = sld [smem:[#allocation3 + $0x101]]
    %v140 = vstv %s139
    %v141 = vmul.f32 %v72, %v140
    %v142 = vmul.f32 %v73, %v140
    %v145 = vrot.slane %v141, 6
    %v146 = vrot.slane %v145, 4
    %v147 = vrot.slane %v142, 6
    %v148 = vrot.slane %v147, 4
    %v151 = vadd.f32 %v137, %v146
    %v152 = vadd.f32 %v138, %v148
    %s153 = sld [smem:[#allocation7 + $0x1]]
    %v154 = vstv %s153
    %v155 = vadd.f32 %v151, %v154
    %v156 = vadd.f32 %v152, %v154
    %v157 = vmax.f32 %v155, 0.0
    %v158 = vmax.f32 %v156, 0.0
    %s159 = sld [smem:[#allocation9 + $0x80]]
    %v160 = vstv %s159
    %v161 = vmul.f32 %v157, %v160
    %v162 = vmul.f32 %v158, %v160
    %v163 = vadd.f32 %v119, %v161
    %v164 = vadd.f32 %v120, %v162
    %v167 = vrot.slane %v163, 3
    %v168 = vrot.slane %v164, 6
    %v169 = vrot.slane %v164, 1
    %vm170 = vcmask 1040384
    %v171 = vsel %vm170, %v163, %v167
    %vm172 = vcmask 1042434
    %v173 = vsel %vm172, %v168, %v169
    %vm174 = vcmask 1041408
    %v175 = vsel %vm174, %v171, %v173
    %v177 = vlaneseq
    %vm178 = vcmp.ge.s32.totalorder %v177, 0
    %vm179 = vcmp.lt.s32.totalorder %v177, 512
    %vm180 = vmand %vm178, %vm179
    %181 = vst.msk [vmem:[#allocation11] sm:$0xf] %vm180, %v175
    // Predicated region
    $region38: #{tpu_custom_call.1} parent=1 // pred_check
      _
    $region39: #{tpu_custom_call.1} parent=1 // pred_check_branch
      %183 = sbr.rel (0) target = $region41
    $region40: #{tpu_custom_call.1} parent=1 // pred_region
      %185 = vsyncadd [#allocation5], 0
      %s187 = sshll.u32 [#allocation11], 4
      %s188 = int_to_ptr.vmem [resolvable:$true] %s187
      %s189 = sshll.u32 %s5, 4
      %s190 = int_to_ptr.hbm [resolvable:$true] %s189
      %192 = dma.vmem_to_hbm [thread:$0]  %s188, 64, %s190, [#allocation5]
    $region41: #{tpu_custom_call.1} parent=1 // pred_fallthru
      _
    // Predicated region
    $region42: #{tpu_custom_call.1} parent=1 // pred_check
      _
    $region43: #{tpu_custom_call.1} parent=1 // pred_check_branch
      %194 = sbr.rel (0) target = $region45
    $region44: #{tpu_custom_call.1} parent=1 // pred_region
      %196 = dma.done [#allocation5], 64
    $region45: #{tpu_custom_call.1} parent=1 // pred_fallthru
      _
    %197 = vsyncpa [#allocation4], 1
    %198 = vsyncpa [#allocation5], 1
    %199 = vsyncpa [#allocation6], 1
    %200 = vsyncpa [#allocation8], 1

</llo_original>
